<compile_context>
chip_gen: v7x
topology: tpu7x:2x2x1
jax: 0.10.0
libtpu: 0.0.40
codegen_flags: <defaults>
</compile_context>

<pallas_src>
import math

import jax
import jax.numpy as jnp
from jax.experimental import pallas as pl
from jax.experimental.pallas import tpu as pltpu


def _elementwise_kernel(x_ref, o_ref):
    # ((x + 5) * 2) - 3 folded to 2*x + 7; explicit f32 compute, sqrt on EUP.
    x = x_ref[...].astype(jnp.float32)
    o_ref[...] = jnp.sqrt(2.0 * x + 7.0).astype(o_ref.dtype)


def _round_up(v: int, m: int) -> int:
    return -(-v // m) * m


def _choose_layout(n: int):
    """Widest lane (multiple of 128) that divides n; pad only if n % 128 != 0."""
    for lane in (2048, 1024, 512, 256, 128):
        if n % lane == 0:
            return lane, n // lane, 0
    # Rare fallback: n not a multiple of 128 — pad up to the next 128 boundary.
    lane = 128
    rows = -(-n // lane)
    return lane, rows, rows * lane - n


def _pick_block_rows(rows: int, lane: int, itemsize: int, sublane: int) -> int:
    """~4 MiB sublane-aligned blocks; cap so large inputs have >= ~8 grid
    steps (megacore split + pipeline ramp). Ragged last block is fine."""
    target_bytes = 4 << 20
    br = max(sublane, (target_bytes // (lane * itemsize)) // sublane * sublane)
    min_steps = 8
    if rows >= min_steps * sublane:
        cap = max(sublane, _round_up(-(-rows // min_steps), sublane))
        br = min(br, cap)
    if br >= rows:
        return rows  # single full-extent block (legal: block dim == array dim)
    return br


def pt_module_forward(x: jax.Array) -> jax.Array:
    """Applies sqrt(((x + 5) * 2) - 3) elementwise, matching PtModule.forward."""
    orig_shape = x.shape
    dtype = x.dtype
    n = math.prod(orig_shape)

    itemsize = jnp.dtype(dtype).itemsize
    # Sublane tile: 8 rows for 32-bit, 16 for 16-bit, 32 for 8-bit dtypes.
    sublane = {4: 8, 2: 16, 1: 32}.get(itemsize, 8)

    lane, rows, pad = _choose_layout(n)

    flat = x.reshape(-1)
    if pad:
        # Only when n % 128 != 0 (pads < 128 elements).
        flat = jnp.pad(flat, (0, pad))
    slab = flat.reshape(rows, lane)

    block_rows = _pick_block_rows(rows, lane, itemsize, sublane)
    grid = (pl.cdiv(rows, block_rows),)

    cost = pl.CostEstimate(
        flops=2 * n,            # one mul + one add per element
        transcendentals=n,      # one sqrt per element
        bytes_accessed=2 * n * itemsize,
    )

    out_slab = pl.pallas_call(
        _elementwise_kernel,
        out_shape=jax.ShapeDtypeStruct((rows, lane), dtype),
        grid=grid,
        in_specs=[pl.BlockSpec((block_rows, lane), lambda i: (i, 0))],
        out_specs=pl.BlockSpec((block_rows, lane), lambda i: (i, 0)),
        compiler_params=pltpu.CompilerParams(
            dimension_semantics=("parallel",),
            vmem_limit_bytes=32 << 20,
        ),
        cost_estimate=cost,
    )(slab)

    out = out_slab.reshape(-1)
    if pad:
        out = out[:n]
    return out.reshape(orig_shape)


if __name__ == "__main__":
    key = jax.random.PRNGKey(0)
    # NCHW input, non-negative so 2x+7 > 0 and sqrt is real (matches the
    # reference module's behavior on typical inputs).
    x = jax.random.uniform(key, (2, 4, 16, 16), dtype=jnp.float32)

    out = pt_module_forward(x)
    out = jax.block_until_ready(out)

    # Reference check in plain JAX, mirroring the PyTorch op sequence.
    ref = jnp.sqrt((x + 5.0) * 2.0 - 3.0)
    assert out.shape == x.shape
    assert jnp.allclose(out, ref, atol=1e-5, rtol=1e-5)

    print("KERNEL_OK")
</pallas_src>

<mosaic_0001>
module attributes {stable_mosaic.version = 11 : i64} {
  func.func @_elementwise_kernel(%arg0: i32, %arg1: memref<1x2048xf32, #tpu.memory_space<vmem>>, %arg2: memref<1x2048xf32, #tpu.memory_space<vmem>>) attributes {dimension_semantics = [#tpu.dimension_semantics<parallel>], iteration_bounds = array<i64: 1>, scalar_prefetch = 0 : i64, scratch_operands = 0 : i64, tpu.core_type = #tpu.core_type<tc>, window_params = [{transform_indices = @transform_0, window_bounds = array<i64: 1, 2048>}, {transform_indices = @transform_1, window_bounds = array<i64: 1, 2048>}]} {
    %c0 = arith.constant 0 : index
    %c0_0 = arith.constant 0 : index
    %0 = vector.load %arg1[%c0, %c0_0] : memref<1x2048xf32, #tpu.memory_space<vmem>>, vector<1x2048xf32>
    %cst = arith.constant 2.000000e+00 : f32
    %1 = vector.broadcast %cst : f32 to vector<1x2048xf32>
    %2 = arith.mulf %1, %0 : vector<1x2048xf32>
    %cst_1 = arith.constant 7.000000e+00 : f32
    %3 = vector.broadcast %cst_1 : f32 to vector<1x2048xf32>
    %4 = arith.addf %2, %3 : vector<1x2048xf32>
    %5 = math.sqrt %4 : vector<1x2048xf32>
    %c0_2 = arith.constant 0 : index
    %c0_3 = arith.constant 0 : index
    %6 = vector.load %arg2[%c0_2, %c0_3] : memref<1x2048xf32, #tpu.memory_space<vmem>>, vector<1x2048xf32>
    tpu.vector_store %arg2[%c0_2, %c0_3], %5 {strides = array<i32>} : memref<1x2048xf32, #tpu.memory_space<vmem>>, vector<1x2048xf32>,
    return
  }
  func.func @transform_0(%arg0: i32) -> (i32, i32) {
    %c0_i32 = arith.constant 0 : i32
    %c0_i32_0 = arith.constant 0 : i32
    return %arg0, %c0_i32 : i32, i32
  }
  func.func @transform_1(%arg0: i32) -> (i32, i32) {
    %c0_i32 = arith.constant 0 : i32
    %c0_i32_0 = arith.constant 0 : i32
    return %arg0, %c0_i32 : i32, i32
  }
}

</mosaic_0001>

<llo_original>
// kernel: tpu_custom_call.1
$region0: #{tpu_custom_call.1}
  #allocation0 [shape = 'u32[]', space=smem, size = 0x4, offset = 0x4, fixed_abs, tag = 'smem constant byte address 0x4 - core index']
  #allocation1 [shape = 'u32[144,128]{1,0:T(1,128)}', space=vmem, size = 0x12000, scoped, tag = 'internal scratch']
  %s0 = inlined_call_operand.hbm [shape: f32[1,2048], index: 0, kind: input, shape index: {}]
  %s1 = inlined_call_operand.hbm [shape: f32[1,2048], index: 1, kind: output, shape index: {}]
  %s2 = sld [smem:[#allocation0]]
  $region18: #{tpu_custom_call.1} parent=0
    _
  %s4 = ssub.s32 1, %s2
  %s5 = scalar_select 0, %s4, %s2
  $region1: #{tpu_custom_call.1} parent=0
    #allocation2 [shape = 'u8[8192]{0}', space=vmem, size = 0x2000, scoped, tag = 'input window, operand 0, single buffered']
    #allocation3 [shape = 's32[1]{0}', space=sflag, size = 0x4, scoped, tag = 'scoped memory for tpu_custom_call.1']
    #allocation4 [shape = 's32[1]{0}', space=sflag, size = 0x4, scoped, tag = 'scoped memory for tpu_custom_call.1']
    #allocation5 [shape = 'u8[8192]{0}', space=vmem, size = 0x2000, scoped, tag = 'output window, operand 0, single buffered']
    %6 = vsyncpa [#allocation3], 0
    %7 = vsyncpa [#allocation4], 0
    // Predicated region
    $region2: #{tpu_custom_call.1} parent=1 // pred_check
      _
    $region3: #{tpu_custom_call.1} parent=1 // pred_check_branch
      %9 = sbr.rel (0) target = $region5
    $region4: #{tpu_custom_call.1} parent=1 // pred_region
      %s11 = ssub.s32 256, 256
      %12 = vsyncadd [#allocation3], %s11
      %s14 = sshll.u32 [#allocation2], 4
      %s15 = int_to_ptr.vmem [resolvable:$true] %s14
      %17 = dma.hbm_to_vmem [thread:$0]  %s0, 256, %s15, [#allocation3]
    $region5: #{tpu_custom_call.1} parent=1 // pred_fallthru
      _
    // Predicated region
    $region6: #{tpu_custom_call.1} parent=1 // pred_check
      _
    $region7: #{tpu_custom_call.1} parent=1 // pred_check_branch
      %19 = sbr.rel (0) target = $region9
    $region8: #{tpu_custom_call.1} parent=1 // pred_region
      %20 = dma.done [#allocation3], 256
    $region9: #{tpu_custom_call.1} parent=1 // pred_fallthru
      _
    %v21 = vld [vmem:[#allocation2] sm:$0xff]
    %v22 = vld [vmem:[#allocation2 + $0x8] sm:$0xff]
    %v23 = vmul.f32 %v21, 2.0
    %v24 = vmul.f32 %v22, 2.0
    %v25 = vadd.f32 %v23, 7.0
    %v26 = vadd.f32 %v24, 7.0
    %v27 = vrsqrt.pop %v25
    %v28 = vmul.f32 %v25, %v27
    %vm29 = vcmp.eq.f32.partialorder %v25, inf
    %v30 = vsel %vm29, %v25, %v28
    %vm31 = vcmp.eq.f32.partialorder %v25, 0.0
    %v32 = vand.u32 %v25, 2147483648
    %v33 = vsel %vm31, %v32, %v30
    %v34 = vrsqrt.pop %v26
    %v35 = vmul.f32 %v26, %v34
    %vm36 = vcmp.eq.f32.partialorder %v26, inf
    %v37 = vsel %vm36, %v26, %v35
    %vm38 = vcmp.eq.f32.partialorder %v26, 0.0
    %v39 = vand.u32 %v26, 2147483648
    %v40 = vsel %vm38, %v39, %v37
    %41 = vst [vmem:[#allocation5] sm:$0xff] %v33
    %42 = vst [vmem:[#allocation5 + $0x8] sm:$0xff] %v40
    // Predicated region
    $region10: #{tpu_custom_call.1} parent=1 // pred_check
      _
    $region11: #{tpu_custom_call.1} parent=1 // pred_check_branch
      %44 = sbr.rel (0) target = $region13
    $region12: #{tpu_custom_call.1} parent=1 // pred_region
      %s46 = ssub.s32 256, 256
      %47 = vsyncadd [#allocation4], %s46
      %s49 = sshll.u32 [#allocation5], 4
      %s50 = int_to_ptr.vmem [resolvable:$true] %s49
      %52 = dma.vmem_to_hbm [thread:$0]  %s50, 256, %s1, [#allocation4]
    $region13: #{tpu_custom_call.1} parent=1 // pred_fallthru
      _
    // Predicated region
    $region14: #{tpu_custom_call.1} parent=1 // pred_check
      _
    $region15: #{tpu_custom_call.1} parent=1 // pred_check_branch
      %54 = sbr.rel (0) target = $region17
    $region16: #{tpu_custom_call.1} parent=1 // pred_region
      %55 = dma.done [#allocation4], 256
    $region17: #{tpu_custom_call.1} parent=1 // pred_fallthru
      _
    %56 = vsyncpa [#allocation3], 1
    %57 = vsyncpa [#allocation4], 1

</llo_original>
